<compile_context>
chip_gen: v7x
topology: tpu7x:2x2x1
jax: 0.10.0
libtpu: 0.0.40
codegen_flags: <defaults>
</compile_context>

<pallas_src>
import functools

import jax
import jax.numpy as jnp
from jax.experimental import pallas as pl
from jax.experimental.pallas import tpu as pltpu


def _make_la_concat_kernel(num_layers):
    """Kernel: fused inner-ReLU -> L accumulated MXU dots -> bias -> outer ReLU."""

    def kernel(*refs):
        x_refs = refs[:num_layers]                 # each (tile_n, H)
        w_ref = refs[num_layers]                   # (L, H, H)  resident
        b_ref = refs[num_layers + 1]               # (1, H)     resident
        o_ref = refs[num_layers + 2]               # (tile_n, H)

        # Layer 0 initializes the f32 accumulator; remaining layers accumulate.
        acc = jnp.dot(jnp.maximum(x_refs[0][...], 0),
                      w_ref[0],
                      preferred_element_type=jnp.float32)
        for l in range(1, num_layers):
            acc = acc + jnp.dot(jnp.maximum(x_refs[l][...], 0),
                                w_ref[l],
                                preferred_element_type=jnp.float32)

        acc = acc + b_ref[...].astype(jnp.float32)      # implicit broadcast
        o_ref[...] = jnp.maximum(acc, 0.0).astype(o_ref.dtype)

    return kernel


def la_op_concat(xs, weight, bias, *, tile_n=1024,
                 vmem_budget_bytes=24 * 1024 * 1024):
    """LaOp with the 'concat' primitive.

    xs:     list of num_layers arrays, each (N, hidden)
    weight: (num_layers*hidden, hidden)   -- i.e. torch Linear.weight.T
    bias:   (hidden,)
    """
    xs = list(xs)
    L = len(xs)
    N, H = xs[0].shape
    assert weight.shape == (L * H, H), (weight.shape, L, H)

    out_dtype = xs[0].dtype
    w3 = weight.reshape(L, H, H)          # w3[l] multiplies layer l's features
    b2 = bias.reshape(1, H)

    # --- VMEM budget: 2x (double buffer) per input tile + output tile,
    #     plus the resident weight.  Keeps us well under v7x's 64 MiB VMEM. ---
    x_is = jnp.dtype(xs[0].dtype).itemsize
    o_is = jnp.dtype(out_dtype).itemsize
    w_bytes = 2 * L * H * H * jnp.dtype(w3.dtype).itemsize
    per_row_bytes = 2 * L * H * x_is + 2 * H * o_is
    max_tile = max((vmem_budget_bytes - w_bytes) // per_row_bytes, 8)

    tile_n = int(min(tile_n, N, max_tile))
    if tile_n < N:
        # sublane constraint: partial node tiles must be a multiple of 8
        tile_n = max((tile_n // 8) * 8, 8)
    grid = (pl.cdiv(N, tile_n),)

    kernel = _make_la_concat_kernel(L)

    in_specs = (
        [pl.BlockSpec((tile_n, H), lambda i: (i, 0)) for _ in range(L)]  # node tiles
        + [pl.BlockSpec((L, H, H), lambda i: (0, 0, 0)),                 # weight, resident
           pl.BlockSpec((1, H), lambda i: (0, 0))]                       # bias, resident
    )

    return pl.pallas_call(
        kernel,
        out_shape=jax.ShapeDtypeStruct((N, H), out_dtype),
        grid_spec=pltpu.PrefetchScalarGridSpec(
            num_scalar_prefetch=0,
            grid=grid,
            in_specs=in_specs,
            out_specs=pl.BlockSpec((tile_n, H), lambda i: (i, 0)),
        ),
        compiler_params=pltpu.CompilerParams(
            dimension_semantics=("parallel",),
            vmem_limit_bytes=32 * 1024 * 1024,
        ),
    )(*xs, w3, b2)


def _reference(xs, weight, bias):
    x = jnp.concatenate(xs, axis=-1)
    y = jnp.dot(jnp.maximum(x, 0.0), weight,
                precision=jax.lax.Precision.HIGHEST,
                preferred_element_type=jnp.float32)
    y = y + bias[None, :]
    return jnp.maximum(y, 0.0).astype(xs[0].dtype)


if __name__ == "__main__":
    # Small, deterministic setup: num_layers=3, hidden=32, N=128 nodes.
    num_layers = 3
    hidden = 32
    N = 128

    key = jax.random.PRNGKey(0)
    k_x, k_w, k_b = jax.random.split(key, 3)

    # Per-layer node features (the "list of layer outputs" LaOp consumes).
    xs_stack = jax.random.normal(k_x, (num_layers, N, hidden), dtype=jnp.float32)
    xs = [xs_stack[i] for i in range(num_layers)]

    # Deterministic Linear(num_layers*hidden -> hidden) params
    # (PyTorch-style uniform(-1/sqrt(fan_in), 1/sqrt(fan_in)) init).
    fan_in = num_layers * hidden
    bound = 1.0 / jnp.sqrt(jnp.float32(fan_in))
    weight = jax.random.uniform(k_w, (fan_in, hidden), jnp.float32, -bound, bound)
    bias = jax.random.uniform(k_b, (hidden,), jnp.float32, -bound, bound)

    out = la_op_concat(xs, weight, bias)
    out = jax.block_until_ready(out)

    ref = _reference(xs, weight, bias)
    assert out.shape == (N, hidden)
    # Tolerance covers f32 accumulation-order differences between the fused
    # per-layer MXU dots and the single concat matmul reference.
    assert jnp.allclose(out, ref, atol=2e-3, rtol=2e-3), "mismatch vs reference"

    print("KERNEL_OK")
</pallas_src>

<mosaic_0001>
module attributes {stable_mosaic.version = 11 : i64} {
  func.func @kernel(%arg0: i32, %arg1: memref<128x32xf32, #tpu.memory_space<vmem>>, %arg2: memref<128x32xf32, #tpu.memory_space<vmem>>, %arg3: memref<128x32xf32, #tpu.memory_space<vmem>>, %arg4: memref<3x32x32xf32, #tpu.memory_space<vmem>>, %arg5: memref<1x32xf32, #tpu.memory_space<vmem>>, %arg6: memref<128x32xf32, #tpu.memory_space<vmem>>) attributes {dimension_semantics = [#tpu.dimension_semantics<parallel>], iteration_bounds = array<i64: 1>, scalar_prefetch = 0 : i64, scratch_operands = 0 : i64, tpu.core_type = #tpu.core_type<tc>, window_params = [{transform_indices = @transform_0, window_bounds = array<i64: 128, 32>}, {transform_indices = @transform_1, window_bounds = array<i64: 128, 32>}, {transform_indices = @transform_2, window_bounds = array<i64: 128, 32>}, {pipeline_mode = #tpu.pipeline_mode<synchronous>, transform_indices = @transform_3, window_bounds = array<i64: 3, 32, 32>}, {pipeline_mode = #tpu.pipeline_mode<synchronous>, transform_indices = @transform_4, window_bounds = array<i64: 1, 32>}, {transform_indices = @transform_5, window_bounds = array<i64: 128, 32>}]} {
    %c0 = arith.constant 0 : index
    %c0_0 = arith.constant 0 : index
    %0 = vector.load %arg1[%c0, %c0_0] : memref<128x32xf32, #tpu.memory_space<vmem>>, vector<128x32xf32>
    %cst = arith.constant 0.000000e+00 : f32
    %1 = vector.broadcast %cst : f32 to vector<128x32xf32>
    %2 = arith.maximumf %0, %1 : vector<128x32xf32>
    %c0_1 = arith.constant 0 : index
    %c0_2 = arith.constant 0 : index
    %c0_3 = arith.constant 0 : index
    %3 = vector.load %arg4[%c0_1, %c0_2, %c0_3] : memref<3x32x32xf32, #tpu.memory_space<vmem>>, vector<1x32x32xf32>
    %4 = vector.shape_cast %3 : vector<1x32x32xf32> to vector<32x32xf32>
    %cst_4 = arith.constant dense<0.000000e+00> : vector<128x32xf32>
    %5 = tpu.matmul %2, %4, %cst_4 {dimension_numbers = #tpu.dot_dimension_numbers<[1], [0], [0], [1], [0, 0, 1, 1], [], []>} : vector<128x32xf32>, vector<32x32xf32>, vector<128x32xf32> -> vector<128x32xf32>
    %c0_5 = arith.constant 0 : index
    %c0_6 = arith.constant 0 : index
    %6 = vector.load %arg2[%c0_5, %c0_6] : memref<128x32xf32, #tpu.memory_space<vmem>>, vector<128x32xf32>
    %cst_7 = arith.constant 0.000000e+00 : f32
    %7 = vector.broadcast %cst_7 : f32 to vector<128x32xf32>
    %8 = arith.maximumf %6, %7 : vector<128x32xf32>
    %c1 = arith.constant 1 : index
    %c0_8 = arith.constant 0 : index
    %c0_9 = arith.constant 0 : index
    %9 = vector.load %arg4[%c1, %c0_8, %c0_9] : memref<3x32x32xf32, #tpu.memory_space<vmem>>, vector<1x32x32xf32>
    %10 = vector.shape_cast %9 : vector<1x32x32xf32> to vector<32x32xf32>
    %cst_10 = arith.constant dense<0.000000e+00> : vector<128x32xf32>
    %11 = tpu.matmul %8, %10, %cst_10 {dimension_numbers = #tpu.dot_dimension_numbers<[1], [0], [0], [1], [0, 0, 1, 1], [], []>} : vector<128x32xf32>, vector<32x32xf32>, vector<128x32xf32> -> vector<128x32xf32>
    %12 = arith.addf %5, %11 : vector<128x32xf32>
    %c0_11 = arith.constant 0 : index
    %c0_12 = arith.constant 0 : index
    %13 = vector.load %arg3[%c0_11, %c0_12] : memref<128x32xf32, #tpu.memory_space<vmem>>, vector<128x32xf32>
    %cst_13 = arith.constant 0.000000e+00 : f32
    %14 = vector.broadcast %cst_13 : f32 to vector<128x32xf32>
    %15 = arith.maximumf %13, %14 : vector<128x32xf32>
    %c2 = arith.constant 2 : index
    %c0_14 = arith.constant 0 : index
    %c0_15 = arith.constant 0 : index
    %16 = vector.load %arg4[%c2, %c0_14, %c0_15] : memref<3x32x32xf32, #tpu.memory_space<vmem>>, vector<1x32x32xf32>
    %17 = vector.shape_cast %16 : vector<1x32x32xf32> to vector<32x32xf32>
    %cst_16 = arith.constant dense<0.000000e+00> : vector<128x32xf32>
    %18 = tpu.matmul %15, %17, %cst_16 {dimension_numbers = #tpu.dot_dimension_numbers<[1], [0], [0], [1], [0, 0, 1, 1], [], []>} : vector<128x32xf32>, vector<32x32xf32>, vector<128x32xf32> -> vector<128x32xf32>
    %19 = arith.addf %12, %18 : vector<128x32xf32>
    %c0_17 = arith.constant 0 : index
    %c0_18 = arith.constant 0 : index
    %20 = vector.load %arg5[%c0_17, %c0_18] : memref<1x32xf32, #tpu.memory_space<vmem>>, vector<1x32xf32>
    %21 = vector.broadcast %20 : vector<1x32xf32> to vector<128x32xf32>
    %22 = arith.addf %19, %21 : vector<128x32xf32>
    %cst_19 = arith.constant 0.000000e+00 : f32
    %23 = vector.broadcast %cst_19 : f32 to vector<128x32xf32>
    %24 = arith.maximumf %22, %23 : vector<128x32xf32>
    %c0_20 = arith.constant 0 : index
    %c0_21 = arith.constant 0 : index
    %25 = vector.load %arg6[%c0_20, %c0_21] : memref<128x32xf32, #tpu.memory_space<vmem>>, vector<128x32xf32>
    tpu.vector_store %arg6[%c0_20, %c0_21], %24 {strides = array<i32>} : memref<128x32xf32, #tpu.memory_space<vmem>>, vector<128x32xf32>,
    return
  }
  func.func @transform_0(%arg0: i32) -> (i32, i32) {
    %c0_i32 = arith.constant 0 : i32
    %c0_i32_0 = arith.constant 0 : i32
    return %arg0, %c0_i32 : i32, i32
  }
  func.func @transform_1(%arg0: i32) -> (i32, i32) {
    %c0_i32 = arith.constant 0 : i32
    %c0_i32_0 = arith.constant 0 : i32
    return %arg0, %c0_i32 : i32, i32
  }
  func.func @transform_2(%arg0: i32) -> (i32, i32) {
    %c0_i32 = arith.constant 0 : i32
    %c0_i32_0 = arith.constant 0 : i32
    return %arg0, %c0_i32 : i32, i32
  }
  func.func @transform_3(%arg0: i32) -> (i32, i32, i32) {
    %c0_i32 = arith.constant 0 : i32
    %c0_i32_0 = arith.constant 0 : i32
    %c0_i32_1 = arith.constant 0 : i32
    %c0_i32_2 = arith.constant 0 : i32
    return %c0_i32, %c0_i32_0, %c0_i32_1 : i32, i32, i32
  }
  func.func @transform_4(%arg0: i32) -> (i32, i32) {
    %c0_i32 = arith.constant 0 : i32
    %c0_i32_0 = arith.constant 0 : i32
    %c0_i32_1 = arith.constant 0 : i32
    return %c0_i32, %c0_i32_0 : i32, i32
  }
  func.func @transform_5(%arg0: i32) -> (i32, i32) {
    %c0_i32 = arith.constant 0 : i32
    %c0_i32_0 = arith.constant 0 : i32
    return %arg0, %c0_i32 : i32, i32
  }
}

</mosaic_0001>

<llo_original>
// kernel: tpu_custom_call.1
$region0: #{tpu_custom_call.1}
  #allocation0 [shape = 'u32[]', space=smem, size = 0x4, offset = 0x4, fixed_abs, tag = 'smem constant byte address 0x4 - core index']
  #allocation1 [shape = 'u32[144,128]{1,0:T(1,128)}', space=vmem, size = 0x12000, scoped, tag = 'internal scratch']
  %s0 = inlined_call_operand.vmem [shape: f32[128,32], index: 0, kind: input, shape index: {}]
  %s1 = inlined_call_operand.vmem [shape: f32[128,32], index: 1, kind: input, shape index: {}]
  %s2 = inlined_call_operand.vmem [shape: f32[128,32], index: 2, kind: input, shape index: {}]
  %s3 = inlined_call_operand.vmem [shape: f32[3,32,32], index: 3, kind: input, shape index: {}]
  %s4 = inlined_call_operand.vmem [shape: f32[1,32], index: 4, kind: input, shape index: {}]
  %s5 = inlined_call_operand.vmem [shape: f32[128,32], index: 5, kind: output, shape index: {}]
  %s6 = sld [smem:[#allocation0]]
  $region30: #{tpu_custom_call.1} parent=0
    _
  %s8 = ssub.s32 1, %s6
  %s9 = scalar_select 0, %s8, %s6
  // Predicated region
  $region2: #{tpu_custom_call.1} parent=0 // pred_check
    _
  $region3: #{tpu_custom_call.1} parent=0 // pred_check_branch
    %11 = sbr.rel (0) target = $region5
  $region4: #{tpu_custom_call.1} parent=0 // pred_region
    _
  $region5: #{tpu_custom_call.1} parent=0 // pred_fallthru
    _
  // Predicated region
  $region6: #{tpu_custom_call.1} parent=0 // pred_check
    _
  $region7: #{tpu_custom_call.1} parent=0 // pred_check_branch
    %13 = sbr.rel (0) target = $region9
  $region8: #{tpu_custom_call.1} parent=0 // pred_region
    _
  $region9: #{tpu_custom_call.1} parent=0 // pred_fallthru
    _
  // Predicated region
  $region10: #{tpu_custom_call.1} parent=0 // pred_check
    _
  $region11: #{tpu_custom_call.1} parent=0 // pred_check_branch
    %15 = sbr.rel (0) target = $region13
  $region12: #{tpu_custom_call.1} parent=0 // pred_region
    _
  $region13: #{tpu_custom_call.1} parent=0 // pred_fallthru
    _
  // Predicated region
  $region14: #{tpu_custom_call.1} parent=0 // pred_check
    _
  $region15: #{tpu_custom_call.1} parent=0 // pred_check_branch
    %17 = sbr.rel (0) target = $region17
  $region16: #{tpu_custom_call.1} parent=0 // pred_region
    _
  $region17: #{tpu_custom_call.1} parent=0 // pred_fallthru
    _
  // Predicated region
  $region18: #{tpu_custom_call.1} parent=0 // pred_check
    _
  $region19: #{tpu_custom_call.1} parent=0 // pred_check_branch
    %19 = sbr.rel (0) target = $region21
  $region20: #{tpu_custom_call.1} parent=0 // pred_region
    _
  $region21: #{tpu_custom_call.1} parent=0 // pred_fallthru
    _
  %v20 = vld [vmem:[%s0] sm:$0xff]
  %v21 = vld [vmem:[%s0 + $0x8] sm:$0xff]
  %v22 = vld [vmem:[%s0 + $0x10] sm:$0xff]
  %v23 = vld [vmem:[%s0 + $0x18] sm:$0xff]
  %v24 = vld [vmem:[%s0 + $0x20] sm:$0xff]
  %v25 = vld [vmem:[%s0 + $0x28] sm:$0xff]
  %v26 = vld [vmem:[%s0 + $0x30] sm:$0xff]
  %v27 = vld [vmem:[%s0 + $0x38] sm:$0xff]
  %v28 = vld [vmem:[%s0 + $0x40] sm:$0xff]
  %v29 = vld [vmem:[%s0 + $0x48] sm:$0xff]
  %v30 = vld [vmem:[%s0 + $0x50] sm:$0xff]
  %v31 = vld [vmem:[%s0 + $0x58] sm:$0xff]
  %v32 = vld [vmem:[%s0 + $0x60] sm:$0xff]
  %v33 = vld [vmem:[%s0 + $0x68] sm:$0xff]
  %v34 = vld [vmem:[%s0 + $0x70] sm:$0xff]
  %v35 = vld [vmem:[%s0 + $0x78] sm:$0xff]
  %v36 = vmax.f32 %v20, 0.0
  %v37 = vmax.f32 %v21, 0.0
  %v38 = vmax.f32 %v22, 0.0
  %v39 = vmax.f32 %v23, 0.0
  %v40 = vmax.f32 %v24, 0.0
  %v41 = vmax.f32 %v25, 0.0
  %v42 = vmax.f32 %v26, 0.0
  %v43 = vmax.f32 %v27, 0.0
  %v44 = vmax.f32 %v28, 0.0
  %v45 = vmax.f32 %v29, 0.0
  %v46 = vmax.f32 %v30, 0.0
  %v47 = vmax.f32 %v31, 0.0
  %v48 = vmax.f32 %v32, 0.0
  %v49 = vmax.f32 %v33, 0.0
  %v50 = vmax.f32 %v34, 0.0
  %v51 = vmax.f32 %v35, 0.0
  %v52 = vld [vmem:[%s3] sm:$0xff]
  %v53 = vld [vmem:[%s3 + $0x8] sm:$0xff]
  %v54 = vld [vmem:[%s3 + $0x10] sm:$0xff]
  %v55 = vld [vmem:[%s3 + $0x18] sm:$0xff]
  %v56 = vld [vmem:[%s1] sm:$0xff]
  %v57 = vld [vmem:[%s1 + $0x8] sm:$0xff]
  %v58 = vld [vmem:[%s1 + $0x10] sm:$0xff]
  %v59 = vld [vmem:[%s1 + $0x18] sm:$0xff]
  %v60 = vld [vmem:[%s1 + $0x20] sm:$0xff]
  %v61 = vld [vmem:[%s1 + $0x28] sm:$0xff]
  %v62 = vld [vmem:[%s1 + $0x30] sm:$0xff]
  %v63 = vld [vmem:[%s1 + $0x38] sm:$0xff]
  %v64 = vld [vmem:[%s1 + $0x40] sm:$0xff]
  %v65 = vld [vmem:[%s1 + $0x48] sm:$0xff]
  %v66 = vld [vmem:[%s1 + $0x50] sm:$0xff]
  %v67 = vld [vmem:[%s1 + $0x58] sm:$0xff]
  %v68 = vld [vmem:[%s1 + $0x60] sm:$0xff]
  %v69 = vld [vmem:[%s1 + $0x68] sm:$0xff]
  %v70 = vld [vmem:[%s1 + $0x70] sm:$0xff]
  %v71 = vld [vmem:[%s1 + $0x78] sm:$0xff]
  %v72 = vmax.f32 %v56, 0.0
  %v73 = vmax.f32 %v57, 0.0
  %v74 = vmax.f32 %v58, 0.0
  %v75 = vmax.f32 %v59, 0.0
  %v76 = vmax.f32 %v60, 0.0
  %v77 = vmax.f32 %v61, 0.0
  %v78 = vmax.f32 %v62, 0.0
  %v79 = vmax.f32 %v63, 0.0
  %v80 = vmax.f32 %v64, 0.0
  %v81 = vmax.f32 %v65, 0.0
  %v82 = vmax.f32 %v66, 0.0
  %v83 = vmax.f32 %v67, 0.0
  %v84 = vmax.f32 %v68, 0.0
  %v85 = vmax.f32 %v69, 0.0
  %v86 = vmax.f32 %v70, 0.0
  %v87 = vmax.f32 %v71, 0.0
  %s88 = scalar_lea.vmem %s3, 32
  %v89 = vld [vmem:[%s88] sm:$0xff]
  %v90 = vld [vmem:[%s88 + $0x8] sm:$0xff]
  %v91 = vld [vmem:[%s88 + $0x10] sm:$0xff]
  %v92 = vld [vmem:[%s88 + $0x18] sm:$0xff]
  %vm93 = vcmask 261120
  %v95 = vsel %vm93, %v72, 0
  %v98 = vsel %vm93, %v73, 0
  %v101 = vsel %vm93, %v74, 0
  %v104 = vsel %vm93, %v75, 0
  %v107 = vsel %vm93, %v76, 0
  %v110 = vsel %vm93, %v77, 0
  %v113 = vsel %vm93, %v78, 0
  %v116 = vsel %vm93, %v79, 0
  %v119 = vsel %vm93, %v80, 0
  %v122 = vsel %vm93, %v81, 0
  %v125 = vsel %vm93, %v82, 0
  %v128 = vsel %vm93, %v83, 0
  %v131 = vsel %vm93, %v84, 0
  %v134 = vsel %vm93, %v85, 0
  %v137 = vsel %vm93, %v86, 0
  %v140 = vsel %vm93, %v87, 0
  %142 = vmatprep.subr.mxu0 0.0
  %143 = vmatpush1.msra.mxu0 %v89
  %144 = vmatprep.subr.mxu0 0.0
  %145 = vmatpush1.msra.mxu0 %v90
  %146 = vmatprep.subr.mxu0 0.0
  %147 = vmatpush1.msra.mxu0 %v91
  %148 = vmatprep.subr.mxu0 0.0
  %149 = vmatpush1.msra.mxu0 %v92
  %150 = vmatprep.subr.mxu0 0.0
  %151 = vmatpush1.msra.mxu0 0.0
  %152 = vmatprep.subr.mxu0 0.0
  %153 = vmatpush1.msra.mxu0 0.0
  %154 = vmatprep.subr.mxu0 0.0
  %155 = vmatpush1.msra.mxu0 0.0
  %156 = vmatprep.subr.mxu0 0.0
  %157 = vmatpush1.msra.mxu0 0.0
  %158 = vmatprep.subr.mxu0 0.0
  %159 = vmatpush1.msra.mxu0 0.0
  %160 = vmatprep.subr.mxu0 0.0
  %161 = vmatpush1.msra.mxu0 0.0
  %162 = vmatprep.subr.mxu0 0.0
  %163 = vmatpush1.msra.mxu0 0.0
  %164 = vmatprep.subr.mxu0 0.0
  %165 = vmatpush1.msra.mxu0 0.0
  %166 = vmatprep.subr.mxu0 0.0
  %167 = vmatpush1.msra.mxu0 0.0
  %168 = vmatprep.subr.mxu0 0.0
  %169 = vmatpush1.msra.mxu0 0.0
  %170 = vmatprep.subr.mxu0 0.0
  %171 = vmatpush1.msra.mxu0 0.0
  %172 = vmatprep.subr.mxu0 0.0
  %173 = vmatpush1.msra.mxu0 0.0
  %174 = vmatprep.subr.mxu0 0.0
  %175 = vmatpush1.msra.mxu0 0.0
  %176 = vmatprep.subr.mxu0 0.0
  %177 = vmatpush1.msra.mxu0 0.0
  %178 = vmatprep.subr.mxu0 0.0
  %179 = vmatpush1.msra.mxu0 0.0
  %180 = vmatprep.subr.mxu0 0.0
  %181 = vmatpush1.msra.mxu0 0.0
  %182 = vmatprep.subr.mxu0 0.0
  %183 = vmatpush1.msra.mxu0 0.0
  %184 = vmatprep.subr.mxu0 0.0
  %185 = vmatpush1.msra.mxu0 0.0
  %186 = vmatprep.subr.mxu0 0.0
  %187 = vmatpush1.msra.mxu0 0.0
  %188 = vmatprep.subr.mxu0 0.0
  %189 = vmatpush1.msra.mxu0 0.0
  %190 = vmatprep.subr.mxu0 0.0
  %191 = vmatpush1.msra.mxu0 0.0
  %192 = vmatprep.subr.mxu0 0.0
  %193 = vmatpush1.msra.mxu0 0.0
  %194 = vmatprep.subr.mxu0 0.0
  %195 = vmatpush1.msra.mxu0 0.0
  %196 = vmatprep.subr.mxu0 0.0
  %197 = vmatpush1.msra.mxu0 0.0
  %198 = vmatprep.subr.mxu0 0.0
  %199 = vmatpush1.msra.mxu0 0.0
  %200 = vmatprep.subr.mxu0 0.0
  %201 = vmatpush1.msra.mxu0 0.0
  %202 = vmatprep.subr.mxu0 0.0
  %203 = vmatpush1.msra.mxu0 0.0
  %204 = vmatprep.subr.mxu0 0.0
  %205 = vmatpush1.msra.mxu0 0.0
  %206 = vmatprep.mubr.f32.mxu0 0.0
  %207 = vmatmul.mubr.f32.gmra.mrb[0].mxu0 %v95
  %v208 = vpop.f32.mrb[0].mxu0
  %v209 = vadd.f32 0.0, %v208
  %v210 = vpop.f32.mrb[0].mxu0
  %211 = vmatprep.mubr.f32.mxu0 0.0
  %212 = vmatmul.mubr.f32.gmra.mrb[0].mxu0 %v98
  %v213 = vpop.f32.mrb[0].mxu0
  %v214 = vadd.f32 0.0, %v213
  %v215 = vpop.f32.mrb[0].mxu0
  %216 = vmatprep.mubr.f32.mxu0 0.0
  %217 = vmatmul.mubr.f32.gmra.mrb[0].mxu0 %v101
  %v218 = vpop.f32.mrb[0].mxu0
  %v219 = vadd.f32 0.0, %v218
  %v220 = vpop.f32.mrb[0].mxu0
  %221 = vmatprep.mubr.f32.mxu0 0.0
  %222 = vmatmul.mubr.f32.gmra.mrb[0].mxu0 %v104
  %v223 = vpop.f32.mrb[0].mxu0
  %v224 = vadd.f32 0.0, %v223
  %v225 = vpop.f32.mrb[0].mxu0
  %226 = vmatprep.mubr.f32.mxu0 0.0
  %227 = vmatmul.mubr.f32.gmra.mrb[0].mxu0 %v107
  %v228 = vpop.f32.mrb[0].mxu0
  %v229 = vadd.f32 0.0, %v228
  %v230 = vpop.f32.mrb[0].mxu0
  %231 = vmatprep.mubr.f32.mxu0 0.0
  %232 = vmatmul.mubr.f32.gmra.mrb[0].mxu0 %v110
  %v233 = vpop.f32.mrb[0].mxu0
  %v234 = vadd.f32 0.0, %v233
  %v235 = vpop.f32.mrb[0].mxu0
  %236 = vmatprep.mubr.f32.mxu0 0.0
  %237 = vmatmul.mubr.f32.gmra.mrb[0].mxu0 %v113
  %v238 = vpop.f32.mrb[0].mxu0
  %v239 = vadd.f32 0.0, %v238
  %v240 = vpop.f32.mrb[0].mxu0
  %241 = vmatprep.mubr.f32.mxu0 0.0
  %242 = vmatmul.mubr.f32.gmra.mrb[0].mxu0 %v116
  %v243 = vpop.f32.mrb[0].mxu0
  %v244 = vadd.f32 0.0, %v243
  %v245 = vpop.f32.mrb[0].mxu0
  %246 = vmatprep.mubr.f32.mxu0 0.0
  %247 = vmatmul.mubr.f32.gmra.mrb[0].mxu0 %v119
  %v248 = vpop.f32.mrb[0].mxu0
  %v249 = vadd.f32 0.0, %v248
  %v250 = vpop.f32.mrb[0].mxu0
  %251 = vmatprep.mubr.f32.mxu0 0.0
  %252 = vmatmul.mubr.f32.gmra.mrb[0].mxu0 %v122
  %v253 = vpop.f32.mrb[0].mxu0
  %v254 = vadd.f32 0.0, %v253
  %v255 = vpop.f32.mrb[0].mxu0
  %256 = vmatprep.mubr.f32.mxu0 0.0
  %257 = vmatmul.mubr.f32.gmra.mrb[0].mxu0 %v125
  %v258 = vpop.f32.mrb[0].mxu0
  %v259 = vadd.f32 0.0, %v258
  %v260 = vpop.f32.mrb[0].mxu0
  %261 = vmatprep.mubr.f32.mxu0 0.0
  %262 = vmatmul.mubr.f32.gmra.mrb[0].mxu0 %v128
  %v263 = vpop.f32.mrb[0].mxu0
  %v264 = vadd.f32 0.0, %v263
  %v265 = vpop.f32.mrb[0].mxu0
  %266 = vmatprep.mubr.f32.mxu0 0.0
  %267 = vmatmul.mubr.f32.gmra.mrb[0].mxu0 %v131
  %v268 = vpop.f32.mrb[0].mxu0
  %v269 = vadd.f32 0.0, %v268
  %v270 = vpop.f32.mrb[0].mxu0
  %271 = vmatprep.mubr.f32.mxu0 0.0
  %272 = vmatmul.mubr.f32.gmra.mrb[0].mxu0 %v134
  %v273 = vpop.f32.mrb[0].mxu0
  %v274 = vadd.f32 0.0, %v273
  %v275 = vpop.f32.mrb[0].mxu0
  %276 = vmatprep.mubr.f32.mxu0 0.0
  %277 = vmatmul.mubr.f32.gmra.mrb[0].mxu0 %v137
  %v278 = vpop.f32.mrb[0].mxu0
  %v279 = vadd.f32 0.0, %v278
  %v280 = vpop.f32.mrb[0].mxu0
  %281 = vmatprep.mubr.f32.mxu0 0.0
  %282 = vmatmul.mubr.f32.gmra.mrb[0].mxu0 %v140
  %v283 = vpop.f32.mrb[0].mxu0
  %v284 = vadd.f32 0.0, %v283
  %v285 = vpop.f32.mrb[0].mxu0
  %286 = vdwg.mxu0
  %v288 = vsel %vm93, %v36, 0
  %v291 = vsel %vm93, %v37, 0
  %v294 = vsel %vm93, %v38, 0
  %v297 = vsel %vm93, %v39, 0
  %v300 = vsel %vm93, %v40, 0
  %v303 = vsel %vm93, %v41, 0
  %v306 = vsel %vm93, %v42, 0
  %v309 = vsel %vm93, %v43, 0
  %v312 = vsel %vm93, %v44, 0
  %v315 = vsel %vm93, %v45, 0
  %v318 = vsel %vm93, %v46, 0
  %v321 = vsel %vm93, %v47, 0
  %v324 = vsel %vm93, %v48, 0
  %v327 = vsel %vm93, %v49, 0
  %v330 = vsel %vm93, %v50, 0
  %v333 = vsel %vm93, %v51, 0
  %335 = vmatprep.subr.mxu0 0.0
  %336 = vmatpush1.msra.mxu0 %v52
  %337 = vmatprep.subr.mxu0 0.0
  %338 = vmatpush1.msra.mxu0 %v53
  %339 = vmatprep.subr.mxu0 0.0
  %340 = vmatpush1.msra.mxu0 %v54
  %341 = vmatprep.subr.mxu0 0.0
  %342 = vmatpush1.msra.mxu0 %v55
  %343 = vmatprep.subr.mxu0 0.0
  %344 = vmatpush1.msra.mxu0 0.0
  %345 = vmatprep.subr.mxu0 0.0
  %346 = vmatpush1.msra.mxu0 0.0
  %347 = vmatprep.subr.mxu0 0.0
  %348 = vmatpush1.msra.mxu0 0.0
  %349 = vmatprep.subr.mxu0 0.0
  %350 = vmatpush1.msra.mxu0 0.0
  %351 = vmatprep.subr.mxu0 0.0
  %352 = vmatpush1.msra.mxu0 0.0
  %353 = vmatprep.subr.mxu0 0.0
  %354 = vmatpush1.msra.mxu0 0.0
  %355 = vmatprep.subr.mxu0 0.0
  %356 = vmatpush1.msra.mxu0 0.0
  %357 = vmatprep.subr.mxu0 0.0
  %358 = vmatpush1.msra.mxu0 0.0
  %359 = vmatprep.subr.mxu0 0.0
  %360 = vmatpush1.msra.mxu0 0.0
  %361 = vmatprep.subr.mxu0 0.0
  %362 = vmatpush1.msra.mxu0 0.0
  %363 = vmatprep.subr.mxu0 0.0
  %364 = vmatpush1.msra.mxu0 0.0
  %365 = vmatprep.subr.mxu0 0.0
  %366 = vmatpush1.msra.mxu0 0.0
  %367 = vmatprep.subr.mxu0 0.0
  %368 = vmatpush1.msra.mxu0 0.0
  %369 = vmatprep.subr.mxu0 0.0
  %370 = vmatpush1.msra.mxu0 0.0
  %371 = vmatprep.subr.mxu0 0.0
  %372 = vmatpush1.msra.mxu0 0.0
  %373 = vmatprep.subr.mxu0 0.0
  %374 = vmatpush1.msra.mxu0 0.0
  %375 = vmatprep.subr.mxu0 0.0
  %376 = vmatpush1.msra.mxu0 0.0
  %377 = vmatprep.subr.mxu0 0.0
  %378 = vmatpush1.msra.mxu0 0.0
  %379 = vmatprep.subr.mxu0 0.0
  %380 = vmatpush1.msra.mxu0 0.0
  %381 = vmatprep.subr.mxu0 0.0
  %382 = vmatpush1.msra.mxu0 0.0
  %383 = vmatprep.subr.mxu0 0.0
  %384 = vmatpush1.msra.mxu0 0.0
  %385 = vmatprep.subr.mxu0 0.0
  %386 = vmatpush1.msra.mxu0 0.0
  %387 = vmatprep.subr.mxu0 0.0
  %388 = vmatpush1.msra.mxu0 0.0
  %389 = vmatprep.subr.mxu0 0.0
  %390 = vmatpush1.msra.mxu0 0.0
  %391 = vmatprep.subr.mxu0 0.0
  %392 = vmatpush1.msra.mxu0 0.0
  %393 = vmatprep.subr.mxu0 0.0
  %394 = vmatpush1.msra.mxu0 0.0
  %395 = vmatprep.subr.mxu0 0.0
  %396 = vmatpush1.msra.mxu0 0.0
  %397 = vmatprep.subr.mxu0 0.0
  %398 = vmatpush1.msra.mxu0 0.0
  %399 = vmatprep.mubr.f32.mxu0 0.0
  %400 = vmatmul.mubr.f32.gmra.mrb[0].mxu0 %v288
  %v401 = vpop.f32.mrb[0].mxu0
  %v402 = vadd.f32 %v209, %v401
  %v403 = vpop.f32.mrb[0].mxu0
  %404 = vmatprep.mubr.f32.mxu0 0.0
  %405 = vmatmul.mubr.f32.gmra.mrb[0].mxu0 %v291
  %v406 = vpop.f32.mrb[0].mxu0
  %v407 = vadd.f32 %v214, %v406
  %v408 = vpop.f32.mrb[0].mxu0
  %409 = vmatprep.mubr.f32.mxu0 0.0
  %410 = vmatmul.mubr.f32.gmra.mrb[0].mxu0 %v294
  %v411 = vpop.f32.mrb[0].mxu0
  %v412 = vadd.f32 %v219, %v411
  %v413 = vpop.f32.mrb[0].mxu0
  %414 = vmatprep.mubr.f32.mxu0 0.0
  %415 = vmatmul.mubr.f32.gmra.mrb[0].mxu0 %v297
  %v416 = vpop.f32.mrb[0].mxu0
  %v417 = vadd.f32 %v224, %v416
  %v418 = vpop.f32.mrb[0].mxu0
  %419 = vmatprep.mubr.f32.mxu0 0.0
  %420 = vmatmul.mubr.f32.gmra.mrb[0].mxu0 %v300
  %v421 = vpop.f32.mrb[0].mxu0
  %v422 = vadd.f32 %v229, %v421
  %v423 = vpop.f32.mrb[0].mxu0
  %424 = vmatprep.mubr.f32.mxu0 0.0
  %425 = vmatmul.mubr.f32.gmra.mrb[0].mxu0 %v303
  %v426 = vpop.f32.mrb[0].mxu0
  %v427 = vadd.f32 %v234, %v426
  %v428 = vpop.f32.mrb[0].mxu0
  %429 = vmatprep.mubr.f32.mxu0 0.0
  %430 = vmatmul.mubr.f32.gmra.mrb[0].mxu0 %v306
  %v431 = vpop.f32.mrb[0].mxu0
  %v432 = vadd.f32 %v239, %v431
  %v433 = vpop.f32.mrb[0].mxu0
  %434 = vmatprep.mubr.f32.mxu0 0.0
  %435 = vmatmul.mubr.f32.gmra.mrb[0].mxu0 %v309
  %v436 = vpop.f32.mrb[0].mxu0
  %v437 = vadd.f32 %v244, %v436
  %v438 = vpop.f32.mrb[0].mxu0
  %439 = vmatprep.mubr.f32.mxu0 0.0
  %440 = vmatmul.mubr.f32.gmra.mrb[0].mxu0 %v312
  %v441 = vpop.f32.mrb[0].mxu0
  %v442 = vadd.f32 %v249, %v441
  %v443 = vpop.f32.mrb[0].mxu0
  %444 = vmatprep.mubr.f32.mxu0 0.0
  %445 = vmatmul.mubr.f32.gmra.mrb[0].mxu0 %v315
  %v446 = vpop.f32.mrb[0].mxu0
  %v447 = vadd.f32 %v254, %v446
  %v448 = vpop.f32.mrb[0].mxu0
  %449 = vmatprep.mubr.f32.mxu0 0.0
  %450 = vmatmul.mubr.f32.gmra.mrb[0].mxu0 %v318
  %v451 = vpop.f32.mrb[0].mxu0
  %v452 = vadd.f32 %v259, %v451
  %v453 = vpop.f32.mrb[0].mxu0
  %454 = vmatprep.mubr.f32.mxu0 0.0
  %455 = vmatmul.mubr.f32.gmra.mrb[0].mxu0 %v321
  %v456 = vpop.f32.mrb[0].mxu0
  %v457 = vadd.f32 %v264, %v456
  %v458 = vpop.f32.mrb[0].mxu0
  %459 = vmatprep.mubr.f32.mxu0 0.0
  %460 = vmatmul.mubr.f32.gmra.mrb[0].mxu0 %v324
  %v461 = vpop.f32.mrb[0].mxu0
  %v462 = vadd.f32 %v269, %v461
  %v463 = vpop.f32.mrb[0].mxu0
  %464 = vmatprep.mubr.f32.mxu0 0.0
  %465 = vmatmul.mubr.f32.gmra.mrb[0].mxu0 %v327
  %v466 = vpop.f32.mrb[0].mxu0
  %v467 = vadd.f32 %v274, %v466
  %v468 = vpop.f32.mrb[0].mxu0
  %469 = vmatprep.mubr.f32.mxu0 0.0
  %470 = vmatmul.mubr.f32.gmra.mrb[0].mxu0 %v330
  %v471 = vpop.f32.mrb[0].mxu0
  %v472 = vadd.f32 %v279, %v471
  %v473 = vpop.f32.mrb[0].mxu0
  %474 = vmatprep.mubr.f32.mxu0 0.0
  %475 = vmatmul.mubr.f32.gmra.mrb[0].mxu0 %v333
  %v476 = vpop.f32.mrb[0].mxu0
  %v477 = vadd.f32 %v284, %v476
  %v478 = vpop.f32.mrb[0].mxu0
  %479 = vdwg.mxu0
  %v480 = vld [vmem:[%s2] sm:$0xff]
  %v481 = vld [vmem:[%s2 + $0x8] sm:$0xff]
  %v482 = vld [vmem:[%s2 + $0x10] sm:$0xff]
  %v483 = vld [vmem:[%s2 + $0x18] sm:$0xff]
  %v484 = vld [vmem:[%s2 + $0x20] sm:$0xff]
  %v485 = vld [vmem:[%s2 + $0x28] sm:$0xff]
  %v486 = vld [vmem:[%s2 + $0x30] sm:$0xff]
  %v487 = vld [vmem:[%s2 + $0x38] sm:$0xff]
  %v488 = vld [vmem:[%s2 + $0x40] sm:$0xff]
  %v489 = vld [vmem:[%s2 + $0x48] sm:$0xff]
  %v490 = vld [vmem:[%s2 + $0x50] sm:$0xff]
  %v491 = vld [vmem:[%s2 + $0x58] sm:$0xff]
  %v492 = vld [vmem:[%s2 + $0x60] sm:$0xff]
  %v493 = vld [vmem:[%s2 + $0x68] sm:$0xff]
  %v494 = vld [vmem:[%s2 + $0x70] sm:$0xff]
  %v495 = vld [vmem:[%s2 + $0x78] sm:$0xff]
  %v496 = vmax.f32 %v480, 0.0
  %v497 = vmax.f32 %v481, 0.0
  %v498 = vmax.f32 %v482, 0.0
  %v499 = vmax.f32 %v483, 0.0
  %v500 = vmax.f32 %v484, 0.0
  %v501 = vmax.f32 %v485, 0.0
  %v502 = vmax.f32 %v486, 0.0
  %v503 = vmax.f32 %v487, 0.0
  %v504 = vmax.f32 %v488, 0.0
  %v505 = vmax.f32 %v489, 0.0
  %v506 = vmax.f32 %v490, 0.0
  %v507 = vmax.f32 %v491, 0.0
  %v508 = vmax.f32 %v492, 0.0
  %v509 = vmax.f32 %v493, 0.0
  %v510 = vmax.f32 %v494, 0.0
  %v511 = vmax.f32 %v495, 0.0
  %s512 = scalar_lea.vmem %s3, 64
  %v513 = vld [vmem:[%s512] sm:$0xff]
  %v514 = vld [vmem:[%s512 + $0x8] sm:$0xff]
  %v515 = vld [vmem:[%s512 + $0x10] sm:$0xff]
  %v516 = vld [vmem:[%s512 + $0x18] sm:$0xff]
  %v518 = vsel %vm93, %v496, 0
  %v521 = vsel %vm93, %v497, 0
  %v524 = vsel %vm93, %v498, 0
  %v527 = vsel %vm93, %v499, 0
  %v530 = vsel %vm93, %v500, 0
  %v533 = vsel %vm93, %v501, 0
  %v536 = vsel %vm93, %v502, 0
  %v539 = vsel %vm93, %v503, 0
  %v542 = vsel %vm93, %v504, 0
  %v545 = vsel %vm93, %v505, 0
  %v548 = vsel %vm93, %v506, 0
  %v551 = vsel %vm93, %v507, 0
  %v554 = vsel %vm93, %v508, 0
  %v557 = vsel %vm93, %v509, 0
  %v560 = vsel %vm93, %v510, 0
  %v563 = vsel %vm93, %v511, 0
  %565 = vmatprep.subr.mxu0 0.0
  %566 = vmatpush1.msra.mxu0 %v513
  %567 = vmatprep.subr.mxu0 0.0
  %568 = vmatpush1.msra.mxu0 %v514
  %569 = vmatprep.subr.mxu0 0.0
  %570 = vmatpush1.msra.mxu0 %v515
  %571 = vmatprep.subr.mxu0 0.0
  %572 = vmatpush1.msra.mxu0 %v516
  %573 = vmatprep.subr.mxu0 0.0
  %574 = vmatpush1.msra.mxu0 0.0
  %575 = vmatprep.subr.mxu0 0.0
  %576 = vmatpush1.msra.mxu0 0.0
  %577 = vmatprep.subr.mxu0 0.0
  %578 = vmatpush1.msra.mxu0 0.0
  %579 = vmatprep.subr.mxu0 0.0
  %580 = vmatpush1.msra.mxu0 0.0
  %581 = vmatprep.subr.mxu0 0.0
  %582 = vmatpush1.msra.mxu0 0.0
  %583 = vmatprep.subr.mxu0 0.0
  %584 = vmatpush1.msra.mxu0 0.0
  %585 = vmatprep.subr.mxu0 0.0
  %586 = vmatpush1.msra.mxu0 0.0
  %587 = vmatprep.subr.mxu0 0.0
  %588 = vmatpush1.msra.mxu0 0.0
  %589 = vmatprep.subr.mxu0 0.0
  %590 = vmatpush1.msra.mxu0 0.0
  %591 = vmatprep.subr.mxu0 0.0
  %592 = vmatpush1.msra.mxu0 0.0
  %593 = vmatprep.subr.mxu0 0.0
  %594 = vmatpush1.msra.mxu0 0.0
  %595 = vmatprep.subr.mxu0 0.0
  %596 = vmatpush1.msra.mxu0 0.0
  %597 = vmatprep.subr.mxu0 0.0
  %598 = vmatpush1.msra.mxu0 0.0
  %599 = vmatprep.subr.mxu0 0.0
  %600 = vmatpush1.msra.mxu0 0.0
  %601 = vmatprep.subr.mxu0 0.0
  %602 = vmatpush1.msra.mxu0 0.0
  %603 = vmatprep.subr.mxu0 0.0
  %604 = vmatpush1.msra.mxu0 0.0
  %605 = vmatprep.subr.mxu0 0.0
  %606 = vmatpush1.msra.mxu0 0.0
  %607 = vmatprep.subr.mxu0 0.0
  %608 = vmatpush1.msra.mxu0 0.0
  %609 = vmatprep.subr.mxu0 0.0
  %610 = vmatpush1.msra.mxu0 0.0
  %611 = vmatprep.subr.mxu0 0.0
  %612 = vmatpush1.msra.mxu0 0.0
  %613 = vmatprep.subr.mxu0 0.0
  %614 = vmatpush1.msra.mxu0 0.0
  %615 = vmatprep.subr.mxu0 0.0
  %616 = vmatpush1.msra.mxu0 0.0
  %617 = vmatprep.subr.mxu0 0.0
  %618 = vmatpush1.msra.mxu0 0.0
  %619 = vmatprep.subr.mxu0 0.0
  %620 = vmatpush1.msra.mxu0 0.0
  %621 = vmatprep.subr.mxu0 0.0
  %622 = vmatpush1.msra.mxu0 0.0
  %623 = vmatprep.subr.mxu0 0.0
  %624 = vmatpush1.msra.mxu0 0.0
  %625 = vmatprep.subr.mxu0 0.0
  %626 = vmatpush1.msra.mxu0 0.0
  %627 = vmatprep.subr.mxu0 0.0
  %628 = vmatpush1.msra.mxu0 0.0
  %629 = vmatprep.mubr.f32.mxu0 0.0
  %630 = vmatmul.mubr.f32.gmra.mrb[0].mxu0 %v518
  %v631 = vpop.f32.mrb[0].mxu0
  %v632 = vadd.f32 0.0, %v631
  %v633 = vpop.f32.mrb[0].mxu0
  %634 = vmatprep.mubr.f32.mxu0 0.0
  %635 = vmatmul.mubr.f32.gmra.mrb[0].mxu0 %v521
  %v636 = vpop.f32.mrb[0].mxu0
  %v637 = vadd.f32 0.0, %v636
  %v638 = vpop.f32.mrb[0].mxu0
  %639 = vmatprep.mubr.f32.mxu0 0.0
  %640 = vmatmul.mubr.f32.gmra.mrb[0].mxu0 %v524
  %v641 = vpop.f32.mrb[0].mxu0
  %v642 = vadd.f32 0.0, %v641
  %v643 = vpop.f32.mrb[0].mxu0
  %644 = vmatprep.mubr.f32.mxu0 0.0
  %645 = vmatmul.mubr.f32.gmra.mrb[0].mxu0 %v527
  %v646 = vpop.f32.mrb[0].mxu0
  %v647 = vadd.f32 0.0, %v646
  %v648 = vpop.f32.mrb[0].mxu0
  %649 = vmatprep.mubr.f32.mxu0 0.0
  %650 = vmatmul.mubr.f32.gmra.mrb[0].mxu0 %v530
  %v651 = vpop.f32.mrb[0].mxu0
  %v652 = vadd.f32 0.0, %v651
  %v653 = vpop.f32.mrb[0].mxu0
  %654 = vmatprep.mubr.f32.mxu0 0.0
  %655 = vmatmul.mubr.f32.gmra.mrb[0].mxu0 %v533
  %v656 = vpop.f32.mrb[0].mxu0
  %v657 = vadd.f32 0.0, %v656
  %v658 = vpop.f32.mrb[0].mxu0
  %659 = vmatprep.mubr.f32.mxu0 0.0
  %660 = vmatmul.mubr.f32.gmra.mrb[0].mxu0 %v536
  %v661 = vpop.f32.mrb[0].mxu0
  %v662 = vadd.f32 0.0, %v661
  %v663 = vpop.f32.mrb[0].mxu0
  %664 = vmatprep.mubr.f32.mxu0 0.0
  %665 = vmatmul.mubr.f32.gmra.mrb[0].mxu0 %v539
  %v666 = vpop.f32.mrb[0].mxu0
  %v667 = vadd.f32 0.0, %v666
  %v668 = vpop.f32.mrb[0].mxu0
  %669 = vmatprep.mubr.f32.mxu0 0.0
  %670 = vmatmul.mubr.f32.gmra.mrb[0].mxu0 %v542
  %v671 = vpop.f32.mrb[0].mxu0
  %v672 = vadd.f32 0.0, %v671
  %v673 = vpop.f32.mrb[0].mxu0
  %674 = vmatprep.mubr.f32.mxu0 0.0
  %675 = vmatmul.mubr.f32.gmra.mrb[0].mxu0 %v545
  %v676 = vpop.f32.mrb[0].mxu0
  %v677 = vadd.f32 0.0, %v676
  %v678 = vpop.f32.mrb[0].mxu0
  %679 = vmatprep.mubr.f32.mxu0 0.0
  %680 = vmatmul.mubr.f32.gmra.mrb[0].mxu0 %v548
  %v681 = vpop.f32.mrb[0].mxu0
  %v682 = vadd.f32 0.0, %v681
  %v683 = vpop.f32.mrb[0].mxu0
  %684 = vmatprep.mubr.f32.mxu0 0.0
  %685 = vmatmul.mubr.f32.gmra.mrb[0].mxu0 %v551
  %v686 = vpop.f32.mrb[0].mxu0
  %v687 = vadd.f32 0.0, %v686
  %v688 = vpop.f32.mrb[0].mxu0
  %689 = vmatprep.mubr.f32.mxu0 0.0
  %690 = vmatmul.mubr.f32.gmra.mrb[0].mxu0 %v554
  %v691 = vpop.f32.mrb[0].mxu0
  %v692 = vadd.f32 0.0, %v691
  %v693 = vpop.f32.mrb[0].mxu0
  %694 = vmatprep.mubr.f32.mxu0 0.0
  %695 = vmatmul.mubr.f32.gmra.mrb[0].mxu0 %v557
  %v696 = vpop.f32.mrb[0].mxu0
  %v697 = vadd.f32 0.0, %v696
  %v698 = vpop.f32.mrb[0].mxu0
  %699 = vmatprep.mubr.f32.mxu0 0.0
  %700 = vmatmul.mubr.f32.gmra.mrb[0].mxu0 %v560
  %v701 = vpop.f32.mrb[0].mxu0
  %v702 = vadd.f32 0.0, %v701
  %v703 = vpop.f32.mrb[0].mxu0
  %704 = vmatprep.mubr.f32.mxu0 0.0
  %705 = vmatmul.mubr.f32.gmra.mrb[0].mxu0 %v563
  %v706 = vpop.f32.mrb[0].mxu0
  %v707 = vadd.f32 0.0, %v706
  %v708 = vpop.f32.mrb[0].mxu0
  %709 = vdwg.mxu0
  %v710 = vadd.f32 %v402, %v632
  %v711 = vadd.f32 %v407, %v637
  %v712 = vadd.f32 %v412, %v642
  %v713 = vadd.f32 %v417, %v647
  %v714 = vadd.f32 %v422, %v652
  %v715 = vadd.f32 %v427, %v657
  %v716 = vadd.f32 %v432, %v662
  %v717 = vadd.f32 %v437, %v667
  %v718 = vadd.f32 %v442, %v672
  %v719 = vadd.f32 %v447, %v677
  %v720 = vadd.f32 %v452, %v682
  %v721 = vadd.f32 %v457, %v687
  %v722 = vadd.f32 %v462, %v692
  %v723 = vadd.f32 %v467, %v697
  %v724 = vadd.f32 %v472, %v702
  %v725 = vadd.f32 %v477, %v707
  %v726 = vld [vmem:[%s4] sm:$0x1]
  %v728 = vlaneseq
  %v729 = vshrl.u32 %v728, 7
  %v730 = vsub.s32 0, %v729
  %v731 = vrot.slane %v726, %v730
  %v733 = vadd.f32 %v710, %v731
  %v734 = vadd.f32 %v711, %v731
  %v735 = vadd.f32 %v712, %v731
  %v736 = vadd.f32 %v713, %v731
  %v737 = vadd.f32 %v714, %v731
  %v738 = vadd.f32 %v715, %v731
  %v739 = vadd.f32 %v716, %v731
  %v740 = vadd.f32 %v717, %v731
  %v741 = vadd.f32 %v718, %v731
  %v742 = vadd.f32 %v719, %v731
  %v743 = vadd.f32 %v720, %v731
  %v744 = vadd.f32 %v721, %v731
  %v745 = vadd.f32 %v722, %v731
  %v746 = vadd.f32 %v723, %v731
  %v747 = vadd.f32 %v724, %v731
  %v748 = vadd.f32 %v725, %v731
  %v749 = vmax.f32 %v733, 0.0
  %v750 = vmax.f32 %v734, 0.0
  %v751 = vmax.f32 %v735, 0.0
  %v752 = vmax.f32 %v736, 0.0
  %v753 = vmax.f32 %v737, 0.0
  %v754 = vmax.f32 %v738, 0.0
  %v755 = vmax.f32 %v739, 0.0
  %v756 = vmax.f32 %v740, 0.0
  %v757 = vmax.f32 %v741, 0.0
  %v758 = vmax.f32 %v742, 0.0
  %v759 = vmax.f32 %v743, 0.0
  %v760 = vmax.f32 %v744, 0.0
  %v761 = vmax.f32 %v745, 0.0
  %v762 = vmax.f32 %v746, 0.0
  %v763 = vmax.f32 %v747, 0.0
  %v764 = vmax.f32 %v748, 0.0
  %765 = vst.msk [vmem:[%s5] sm:$0xff] %vm93, %v749
  %766 = vst.msk [vmem:[%s5 + $0x8] sm:$0xff] %vm93, %v750
  %767 = vst.msk [vmem:[%s5 + $0x10] sm:$0xff] %vm93, %v751
  %768 = vst.msk [vmem:[%s5 + $0x18] sm:$0xff] %vm93, %v752
  %769 = vst.msk [vmem:[%s5 + $0x20] sm:$0xff] %vm93, %v753
  %770 = vst.msk [vmem:[%s5 + $0x28] sm:$0xff] %vm93, %v754
  %771 = vst.msk [vmem:[%s5 + $0x30] sm:$0xff] %vm93, %v755
  %772 = vst.msk [vmem:[%s5 + $0x38] sm:$0xff] %vm93, %v756
  %773 = vst.msk [vmem:[%s5 + $0x40] sm:$0xff] %vm93, %v757
  %774 = vst.msk [vmem:[%s5 + $0x48] sm:$0xff] %vm93, %v758
  %775 = vst.msk [vmem:[%s5 + $0x50] sm:$0xff] %vm93, %v759
  %776 = vst.msk [vmem:[%s5 + $0x58] sm:$0xff] %vm93, %v760
  %777 = vst.msk [vmem:[%s5 + $0x60] sm:$0xff] %vm93, %v761
  %778 = vst.msk [vmem:[%s5 + $0x68] sm:$0xff] %vm93, %v762
  %779 = vst.msk [vmem:[%s5 + $0x70] sm:$0xff] %vm93, %v763
  %780 = vst.msk [vmem:[%s5 + $0x78] sm:$0xff] %vm93, %v764
  // Predicated region
  $region22: #{tpu_custom_call.1} parent=0 // pred_check
    _
  $region23: #{tpu_custom_call.1} parent=0 // pred_check_branch
    %782 = sbr.rel (0) target = $region25
  $region24: #{tpu_custom_call.1} parent=0 // pred_region
    _
  $region25: #{tpu_custom_call.1} parent=0 // pred_fallthru
    _
  // Predicated region
  $region26: #{tpu_custom_call.1} parent=0 // pred_check
    _
  $region27: #{tpu_custom_call.1} parent=0 // pred_check_branch
    %784 = sbr.rel (0) target = $region29
  $region28: #{tpu_custom_call.1} parent=0 // pred_region
    _
  $region29: #{tpu_custom_call.1} parent=0 // pred_fallthru
    _

</llo_original>
